<compile_context>
chip_gen: v7x
topology: tpu7x:2x2x1
jax: 0.10.0
libtpu: 0.0.40
codegen_flags: <defaults>
</compile_context>

<pallas_src>
import functools

import jax
import jax.numpy as jnp
from jax.experimental import pallas as pl
from jax.experimental.pallas import tpu as pltpu

LN_EPS = 1e-5          # torch.nn.LayerNorm default
N_HEADS = 3            # reconstruction, contrastive, supervised


# ---------------------------------------------------------------------------
# Kernel
# ---------------------------------------------------------------------------
def fused_heads_kernel(x_ref, emb_ref, w1_ref, b1_ref, g_ref, bt_ref,
                       w2_ref, b2_ref, o_ref, *, d_outs):
    """tanh(x@E) -> 3x [linear1 -> layernorm -> relu -> linear2] -> concat store."""
    x = x_ref[...].astype(jnp.float32)                                   # (TM, n_feat)

    # Backbone stand-in, fused: h stays in VMEM and feeds all three heads.
    h = jnp.tanh(jnp.dot(x, emb_ref[...], preferred_element_type=jnp.float32))

    w1 = w1_ref[...]        # (3, n_dims, n_dims)
    b1 = b1_ref[...]        # (3, 1, n_dims)
    g  = g_ref[...]         # (3, 1, n_dims)
    bt = bt_ref[...]        # (3, 1, n_dims)
    w2 = w2_ref[...]        # (n_dims, d_total)   heads' W2 concatenated on columns
    b2 = b2_ref[...]        # (1, d_total)

    outs = []
    off = 0
    for k in range(len(d_outs)):                    # static unroll over the 3 heads
        dk = d_outs[k]
        hk = jnp.dot(h, w1[k], preferred_element_type=jnp.float32) + b1[k]
        # LayerNorm over the feature dim (biased variance, eps=1e-5, torch semantics)
        mu = jnp.mean(hk, axis=-1, keepdims=True)
        var = jnp.mean((hk - mu) * (hk - mu), axis=-1, keepdims=True)
        hn = (hk - mu) * jax.lax.rsqrt(var + LN_EPS) * g[k] + bt[k]
        hr = jnp.maximum(hn, 0.0)
        outs.append(
            jnp.dot(hr, w2[:, off:off + dk], preferred_element_type=jnp.float32)
            + b2[:, off:off + dk]
        )
        off += dk

    # Single lane-dense store of all three head outputs.
    o_ref[...] = jnp.concatenate(outs, axis=-1).astype(o_ref.dtype)


# ---------------------------------------------------------------------------
# Wrapper
# ---------------------------------------------------------------------------
def _pick_tm(batch):
    """Batch tile: large rows per step when B is big, whole batch otherwise."""
    for tm in (1024, 512, 256, 128):
        if batch >= tm and batch % tm == 0:
            return tm
    return batch


def fused_dataset_forward(x, params):
    """Run backbone stand-in + all 3 heads of one dataset in one pallas_call.

    x: (B, n_feat) f32.  Returns (rec, con, sup) with shapes
    (B, d_rec), (B, d_con), (B, d_sup).
    """
    B, n_feat = x.shape
    n_dims = params["embed"].shape[1]
    d_outs = params["d_outs"]
    d_total = sum(d_outs)

    tm = _pick_tm(B)
    grid = (B // tm,)

    kernel = functools.partial(fused_heads_kernel, d_outs=d_outs)

    flops = (2 * B * n_feat * n_dims                       # embed matmul
             + N_HEADS * 2 * B * n_dims * n_dims           # linear1 x3
             + 2 * B * n_dims * d_total)                   # linear2 (all heads)
    bytes_accessed = 4 * (x.size
                          + params["embed"].size
                          + params["w1"].size + params["b1"].size
                          + params["gamma"].size + params["beta"].size
                          + params["w2cat"].size + params["b2cat"].size
                          + B * d_total)

    out = pl.pallas_call(
        kernel,
        out_shape=jax.ShapeDtypeStruct((B, d_total), jnp.float32),
        grid_spec=pltpu.PrefetchScalarGridSpec(
            num_scalar_prefetch=0,
            grid=grid,
            in_specs=[
                pl.BlockSpec((tm, n_feat), lambda i: (i, 0)),            # x tile
                pl.BlockSpec((n_feat, n_dims), lambda i: (0, 0)),        # embed (resident)
                pl.BlockSpec((N_HEADS, n_dims, n_dims), lambda i: (0, 0, 0)),
                pl.BlockSpec((N_HEADS, 1, n_dims), lambda i: (0, 0, 0)),
                pl.BlockSpec((N_HEADS, 1, n_dims), lambda i: (0, 0, 0)),
                pl.BlockSpec((N_HEADS, 1, n_dims), lambda i: (0, 0, 0)),
                pl.BlockSpec((n_dims, d_total), lambda i: (0, 0)),
                pl.BlockSpec((1, d_total), lambda i: (0, 0)),
            ],
            out_specs=pl.BlockSpec((tm, d_total), lambda i: (i, 0)),
        ),
        compiler_params=pltpu.CompilerParams(
            dimension_semantics=("parallel",),        # shards batch tiles across TCs (v7x)
            vmem_limit_bytes=64 * 1024 * 1024,
        ),
        cost_estimate=pl.CostEstimate(
            flops=flops, transcendentals=B * n_dims, bytes_accessed=bytes_accessed),
    )(
        x,
        params["embed"],
        params["w1"],
        params["b1"],
        params["gamma"],
        params["beta"],
        params["w2cat"],
        params["b2cat"],
    )

    d0, d1, _ = d_outs
    rec = out[:, :d0]
    con = out[:, d0:d0 + d1]
    sup = out[:, d0 + d1:]
    return rec, con, sup


# ---------------------------------------------------------------------------
# Params & reference
# ---------------------------------------------------------------------------
def _init_one_head(key, d_in, d_out):
    k1, k2, k3, k4 = jax.random.split(key, 4)
    s = 1.0 / jnp.sqrt(d_in)
    return {
        "w1": jax.random.uniform(k1, (d_in, d_in), jnp.float32, -s, s),
        "b1": jax.random.uniform(k2, (1, d_in), jnp.float32, -s, s),
        "gamma": jnp.ones((1, d_in), jnp.float32),
        "beta": jnp.zeros((1, d_in), jnp.float32),
        "w2": jax.random.uniform(k3, (d_in, d_out), jnp.float32, -s, s),
        "b2": jax.random.uniform(k4, (1, d_out), jnp.float32, -s, s),
    }


def init_dataset_params(key, n_feat, n_dims, d_out_sup):
    """Stacked params for one dataset: embed + 3 heads (rec, con, sup)."""
    ke, kr, kc, ks = jax.random.split(key, 4)
    heads = [
        _init_one_head(kr, n_dims, n_feat),   # reconstruction
        _init_one_head(kc, n_dims, n_feat),   # contrastive
        _init_one_head(ks, n_dims, d_out_sup) # supervised
    ]
    return {
        # TODO(synk): external rtdl backbone replaced by deterministic linear stand-in.
        "embed": jax.random.normal(ke, (n_feat, n_dims), jnp.float32) / jnp.sqrt(n_feat),
        "w1": jnp.stack([h["w1"] for h in heads]),               # (3, n_dims, n_dims)
        "b1": jnp.stack([h["b1"] for h in heads]),               # (3, 1, n_dims)
        "gamma": jnp.stack([h["gamma"] for h in heads]),
        "beta": jnp.stack([h["beta"] for h in heads]),
        "w2cat": jnp.concatenate([h["w2"] for h in heads], axis=1),  # (n_dims, d_total)
        "b2cat": jnp.concatenate([h["b2"] for h in heads], axis=1),  # (1, d_total)
        "d_outs": (n_feat, n_feat, d_out_sup),
    }


def fused_dataset_reference(x, params):
    """Pure-JAX reference (matches torch LayerNorm / Linear semantics)."""
    h = jnp.tanh(x @ params["embed"])
    outs = []
    off = 0
    for k in range(N_HEADS):
        dk = params["d_outs"][k]
        hk = h @ params["w1"][k] + params["b1"][k]
        mu = jnp.mean(hk, axis=-1, keepdims=True)
        var = jnp.mean((hk - mu) ** 2, axis=-1, keepdims=True)
        hn = (hk - mu) / jnp.sqrt(var + LN_EPS) * params["gamma"][k] + params["beta"][k]
        hr = jnp.maximum(hn, 0.0)
        outs.append(hr @ params["w2cat"][:, off:off + dk] + params["b2cat"][:, off:off + dk])
        off += dk
    return outs[0], outs[1], outs[2]


# ---------------------------------------------------------------------------
# Model (mirrors PyTorch Model, mode='train')
# ---------------------------------------------------------------------------
class PallasModel:
    def __init__(self, key, num_datasets, n_features_list, d_out, n_dims):
        self.num_datasets = num_datasets
        keys = jax.random.split(key, num_datasets)
        self.params = [
            init_dataset_params(keys[i], n_features_list[i], n_dims, d_out)
            for i in range(num_datasets)
        ]

    def __call__(self, xs):
        reconstruction, contrast, prediction = [], [], []
        for i in range(self.num_datasets):
            rec, con, sup = fused_dataset_forward(xs[i], self.params[i])
            reconstruction.append(rec)
            contrast.append(con)
            prediction.append(sup)
        return reconstruction, contrast, prediction

    def reference(self, xs):
        reconstruction, contrast, prediction = [], [], []
        for i in range(self.num_datasets):
            rec, con, sup = fused_dataset_reference(xs[i], self.params[i])
            reconstruction.append(rec)
            contrast.append(con)
            prediction.append(sup)
        return reconstruction, contrast, prediction


# ---------------------------------------------------------------------------
# Main
# ---------------------------------------------------------------------------
if __name__ == "__main__":
    key = jax.random.PRNGKey(0)

    # Small synthetic config
    num_datasets = 2
    n_features_list = [16, 12]
    n_dims = 32          # args.n_dims (d_in of the heads)
    d_out_sup = 4        # supervised head output dim
    batch = 8

    k_model, k_x0, k_x1 = jax.random.split(key, 3)
    model = PallasModel(k_model, num_datasets, n_features_list, d_out_sup, n_dims)

    xs = [
        jax.random.normal(k_x0, (batch, n_features_list[0]), jnp.float32),
        jax.random.normal(k_x1, (batch, n_features_list[1]), jnp.float32),
    ]

    rec, con, pred = model(xs)
    jax.block_until_ready((rec, con, pred))

    # correctness check against plain-JAX reference
    rec_r, con_r, pred_r = model.reference(xs)
    for a, b in zip(rec + con + pred, rec_r + con_r + pred_r):
        assert jnp.allclose(a, b, atol=2e-3, rtol=2e-3), "mismatch vs reference"

    # sanity on shapes
    assert rec[0].shape == (batch, n_features_list[0])
    assert con[1].shape == (batch, n_features_list[1])
    assert pred[0].shape == (batch, d_out_sup)

    print("KERNEL_OK")
</pallas_src>

<mosaic_0001>
module attributes {stable_mosaic.version = 11 : i64} {
  func.func @fused_heads_kernel(%arg0: i32, %arg1: memref<8x16xf32, #tpu.memory_space<vmem>>, %arg2: memref<16x32xf32, #tpu.memory_space<vmem>>, %arg3: memref<3x32x32xf32, #tpu.memory_space<vmem>>, %arg4: memref<3x1x32xf32, #tpu.memory_space<vmem>>, %arg5: memref<3x1x32xf32, #tpu.memory_space<vmem>>, %arg6: memref<3x1x32xf32, #tpu.memory_space<vmem>>, %arg7: memref<32x36xf32, #tpu.memory_space<vmem>>, %arg8: memref<1x36xf32, #tpu.memory_space<vmem>>, %arg9: memref<8x36xf32, #tpu.memory_space<vmem>>) attributes {dimension_semantics = [#tpu.dimension_semantics<parallel>], iteration_bounds = array<i64: 1>, scalar_prefetch = 0 : i64, scratch_operands = 0 : i64, tpu.core_type = #tpu.core_type<tc>, window_params = [{transform_indices = @transform_0, window_bounds = array<i64: 8, 16>}, {pipeline_mode = #tpu.pipeline_mode<synchronous>, transform_indices = @transform_1, window_bounds = array<i64: 16, 32>}, {pipeline_mode = #tpu.pipeline_mode<synchronous>, transform_indices = @transform_2, window_bounds = array<i64: 3, 32, 32>}, {pipeline_mode = #tpu.pipeline_mode<synchronous>, transform_indices = @transform_3, window_bounds = array<i64: 3, 1, 32>}, {pipeline_mode = #tpu.pipeline_mode<synchronous>, transform_indices = @transform_4, window_bounds = array<i64: 3, 1, 32>}, {pipeline_mode = #tpu.pipeline_mode<synchronous>, transform_indices = @transform_5, window_bounds = array<i64: 3, 1, 32>}, {pipeline_mode = #tpu.pipeline_mode<synchronous>, transform_indices = @transform_6, window_bounds = array<i64: 32, 36>}, {pipeline_mode = #tpu.pipeline_mode<synchronous>, transform_indices = @transform_7, window_bounds = array<i64: 1, 36>}, {transform_indices = @transform_8, window_bounds = array<i64: 8, 36>}]} {
    %c0 = arith.constant 0 : index
    %c0_0 = arith.constant 0 : index
    %0 = vector.load %arg1[%c0, %c0_0] : memref<8x16xf32, #tpu.memory_space<vmem>>, vector<8x16xf32>
    %c0_1 = arith.constant 0 : index
    %c0_2 = arith.constant 0 : index
    %1 = vector.load %arg2[%c0_1, %c0_2] : memref<16x32xf32, #tpu.memory_space<vmem>>, vector<16x32xf32>
    %cst = arith.constant dense<0.000000e+00> : vector<8x32xf32>
    %2 = tpu.matmul %0, %1, %cst {dimension_numbers = #tpu.dot_dimension_numbers<[1], [0], [0], [1], [0, 0, 1, 1], [], []>} : vector<8x16xf32>, vector<16x32xf32>, vector<8x32xf32> -> vector<8x32xf32>
    %3 = math.tanh %2 : vector<8x32xf32>
    %c0_3 = arith.constant 0 : index
    %c0_4 = arith.constant 0 : index
    %c0_5 = arith.constant 0 : index
    %4 = vector.load %arg3[%c0_3, %c0_4, %c0_5] : memref<3x32x32xf32, #tpu.memory_space<vmem>>, vector<3x32x32xf32>
    %c0_6 = arith.constant 0 : index
    %c0_7 = arith.constant 0 : index
    %c0_8 = arith.constant 0 : index
    %5 = vector.load %arg4[%c0_6, %c0_7, %c0_8] : memref<3x1x32xf32, #tpu.memory_space<vmem>>, vector<3x1x32xf32>
    %c0_9 = arith.constant 0 : index
    %c0_10 = arith.constant 0 : index
    %c0_11 = arith.constant 0 : index
    %6 = vector.load %arg5[%c0_9, %c0_10, %c0_11] : memref<3x1x32xf32, #tpu.memory_space<vmem>>, vector<3x1x32xf32>
    %c0_12 = arith.constant 0 : index
    %c0_13 = arith.constant 0 : index
    %c0_14 = arith.constant 0 : index
    %7 = vector.load %arg6[%c0_12, %c0_13, %c0_14] : memref<3x1x32xf32, #tpu.memory_space<vmem>>, vector<3x1x32xf32>
    %c0_15 = arith.constant 0 : index
    %c0_16 = arith.constant 0 : index
    %8 = vector.load %arg7[%c0_15, %c0_16] : memref<32x36xf32, #tpu.memory_space<vmem>>, vector<32x36xf32>
    %c0_17 = arith.constant 0 : index
    %c0_18 = arith.constant 0 : index
    %9 = vector.load %arg8[%c0_17, %c0_18] : memref<1x36xf32, #tpu.memory_space<vmem>>, vector<1x36xf32>
    %10 = vector.extract_strided_slice %4 {offsets = [0, 0, 0], sizes = [1, 32, 32], strides = [1, 1, 1]} : vector<3x32x32xf32> to vector<1x32x32xf32>
    %11 = vector.shape_cast %10 : vector<1x32x32xf32> to vector<32x32xf32>
    %cst_19 = arith.constant dense<0.000000e+00> : vector<8x32xf32>
    %12 = tpu.matmul %3, %11, %cst_19 {dimension_numbers = #tpu.dot_dimension_numbers<[1], [0], [0], [1], [0, 0, 1, 1], [], []>} : vector<8x32xf32>, vector<32x32xf32>, vector<8x32xf32> -> vector<8x32xf32>
    %13 = vector.extract_strided_slice %5 {offsets = [0, 0, 0], sizes = [1, 1, 32], strides = [1, 1, 1]} : vector<3x1x32xf32> to vector<1x1x32xf32>
    %14 = vector.shape_cast %13 : vector<1x1x32xf32> to vector<1x32xf32>
    %15 = vector.broadcast %14 : vector<1x32xf32> to vector<8x32xf32>
    %16 = arith.addf %12, %15 : vector<8x32xf32>
    %cst_20 = arith.constant dense<0.000000e+00> : vector<8xf32>
    %17 = vector.multi_reduction <add>, %16, %cst_20 [1] : vector<8x32xf32> to vector<8xf32>
    %18 = vector.shape_cast %17 : vector<8xf32> to vector<8x1xf32>
    %cst_21 = arith.constant 3.200000e+01 : f32
    %19 = vector.broadcast %cst_21 : f32 to vector<8x1xf32>
    %20 = arith.divf %18, %19 : vector<8x1xf32>
    %21 = vector.broadcast %20 : vector<8x1xf32> to vector<8x32xf32>
    %22 = arith.subf %16, %21 : vector<8x32xf32>
    %23 = vector.broadcast %20 : vector<8x1xf32> to vector<8x32xf32>
    %24 = arith.subf %16, %23 : vector<8x32xf32>
    %25 = arith.mulf %22, %24 : vector<8x32xf32>
    %cst_22 = arith.constant dense<0.000000e+00> : vector<8xf32>
    %26 = vector.multi_reduction <add>, %25, %cst_22 [1] : vector<8x32xf32> to vector<8xf32>
    %27 = vector.shape_cast %26 : vector<8xf32> to vector<8x1xf32>
    %cst_23 = arith.constant 3.200000e+01 : f32
    %28 = vector.broadcast %cst_23 : f32 to vector<8x1xf32>
    %29 = arith.divf %27, %28 : vector<8x1xf32>
    %30 = vector.broadcast %20 : vector<8x1xf32> to vector<8x32xf32>
    %31 = arith.subf %16, %30 : vector<8x32xf32>
    %cst_24 = arith.constant 9.99999974E-6 : f32
    %32 = vector.broadcast %cst_24 : f32 to vector<8x1xf32>
    %33 = arith.addf %29, %32 : vector<8x1xf32>
    %34 = math.rsqrt %33 : vector<8x1xf32>
    %35 = vector.broadcast %34 : vector<8x1xf32> to vector<8x32xf32>
    %36 = arith.mulf %31, %35 : vector<8x32xf32>
    %37 = vector.extract_strided_slice %6 {offsets = [0, 0, 0], sizes = [1, 1, 32], strides = [1, 1, 1]} : vector<3x1x32xf32> to vector<1x1x32xf32>
    %38 = vector.shape_cast %37 : vector<1x1x32xf32> to vector<1x32xf32>
    %39 = vector.broadcast %38 : vector<1x32xf32> to vector<8x32xf32>
    %40 = arith.mulf %36, %39 : vector<8x32xf32>
    %41 = vector.extract_strided_slice %7 {offsets = [0, 0, 0], sizes = [1, 1, 32], strides = [1, 1, 1]} : vector<3x1x32xf32> to vector<1x1x32xf32>
    %42 = vector.shape_cast %41 : vector<1x1x32xf32> to vector<1x32xf32>
    %43 = vector.broadcast %42 : vector<1x32xf32> to vector<8x32xf32>
    %44 = arith.addf %40, %43 : vector<8x32xf32>
    %cst_25 = arith.constant 0.000000e+00 : f32
    %45 = vector.broadcast %cst_25 : f32 to vector<8x32xf32>
    %46 = arith.maximumf %44, %45 : vector<8x32xf32>
    %47 = vector.extract_strided_slice %8 {offsets = [0, 0], sizes = [32, 16], strides = [1, 1]} : vector<32x36xf32> to vector<32x16xf32>
    %cst_26 = arith.constant dense<0.000000e+00> : vector<8x16xf32>
    %48 = tpu.matmul %46, %47, %cst_26 {dimension_numbers = #tpu.dot_dimension_numbers<[1], [0], [0], [1], [0, 0, 1, 1], [], []>} : vector<8x32xf32>, vector<32x16xf32>, vector<8x16xf32> -> vector<8x16xf32>
    %49 = vector.extract_strided_slice %9 {offsets = [0, 0], sizes = [1, 16], strides = [1, 1]} : vector<1x36xf32> to vector<1x16xf32>
    %50 = vector.broadcast %49 : vector<1x16xf32> to vector<8x16xf32>
    %51 = arith.addf %48, %50 : vector<8x16xf32>
    %52 = vector.extract_strided_slice %4 {offsets = [1, 0, 0], sizes = [1, 32, 32], strides = [1, 1, 1]} : vector<3x32x32xf32> to vector<1x32x32xf32>
    %53 = vector.shape_cast %52 : vector<1x32x32xf32> to vector<32x32xf32>
    %cst_27 = arith.constant dense<0.000000e+00> : vector<8x32xf32>
    %54 = tpu.matmul %3, %53, %cst_27 {dimension_numbers = #tpu.dot_dimension_numbers<[1], [0], [0], [1], [0, 0, 1, 1], [], []>} : vector<8x32xf32>, vector<32x32xf32>, vector<8x32xf32> -> vector<8x32xf32>
    %55 = vector.extract_strided_slice %5 {offsets = [1, 0, 0], sizes = [1, 1, 32], strides = [1, 1, 1]} : vector<3x1x32xf32> to vector<1x1x32xf32>
    %56 = vector.shape_cast %55 : vector<1x1x32xf32> to vector<1x32xf32>
    %57 = vector.broadcast %56 : vector<1x32xf32> to vector<8x32xf32>
    %58 = arith.addf %54, %57 : vector<8x32xf32>
    %cst_28 = arith.constant dense<0.000000e+00> : vector<8xf32>
    %59 = vector.multi_reduction <add>, %58, %cst_28 [1] : vector<8x32xf32> to vector<8xf32>
    %60 = vector.shape_cast %59 : vector<8xf32> to vector<8x1xf32>
    %cst_29 = arith.constant 3.200000e+01 : f32
    %61 = vector.broadcast %cst_29 : f32 to vector<8x1xf32>
    %62 = arith.divf %60, %61 : vector<8x1xf32>
    %63 = vector.broadcast %62 : vector<8x1xf32> to vector<8x32xf32>
    %64 = arith.subf %58, %63 : vector<8x32xf32>
    %65 = vector.broadcast %62 : vector<8x1xf32> to vector<8x32xf32>
    %66 = arith.subf %58, %65 : vector<8x32xf32>
    %67 = arith.mulf %64, %66 : vector<8x32xf32>
    %cst_30 = arith.constant dense<0.000000e+00> : vector<8xf32>
    %68 = vector.multi_reduction <add>, %67, %cst_30 [1] : vector<8x32xf32> to vector<8xf32>
    %69 = vector.shape_cast %68 : vector<8xf32> to vector<8x1xf32>
    %cst_31 = arith.constant 3.200000e+01 : f32
    %70 = vector.broadcast %cst_31 : f32 to vector<8x1xf32>
    %71 = arith.divf %69, %70 : vector<8x1xf32>
    %72 = vector.broadcast %62 : vector<8x1xf32> to vector<8x32xf32>
    %73 = arith.subf %58, %72 : vector<8x32xf32>
    %cst_32 = arith.constant 9.99999974E-6 : f32
    %74 = vector.broadcast %cst_32 : f32 to vector<8x1xf32>
    %75 = arith.addf %71, %74 : vector<8x1xf32>
    %76 = math.rsqrt %75 : vector<8x1xf32>
    %77 = vector.broadcast %76 : vector<8x1xf32> to vector<8x32xf32>
    %78 = arith.mulf %73, %77 : vector<8x32xf32>
    %79 = vector.extract_strided_slice %6 {offsets = [1, 0, 0], sizes = [1, 1, 32], strides = [1, 1, 1]} : vector<3x1x32xf32> to vector<1x1x32xf32>
    %80 = vector.shape_cast %79 : vector<1x1x32xf32> to vector<1x32xf32>
    %81 = vector.broadcast %80 : vector<1x32xf32> to vector<8x32xf32>
    %82 = arith.mulf %78, %81 : vector<8x32xf32>
    %83 = vector.extract_strided_slice %7 {offsets = [1, 0, 0], sizes = [1, 1, 32], strides = [1, 1, 1]} : vector<3x1x32xf32> to vector<1x1x32xf32>
    %84 = vector.shape_cast %83 : vector<1x1x32xf32> to vector<1x32xf32>
    %85 = vector.broadcast %84 : vector<1x32xf32> to vector<8x32xf32>
    %86 = arith.addf %82, %85 : vector<8x32xf32>
    %cst_33 = arith.constant 0.000000e+00 : f32
    %87 = vector.broadcast %cst_33 : f32 to vector<8x32xf32>
    %88 = arith.maximumf %86, %87 : vector<8x32xf32>
    %89 = vector.extract_strided_slice %8 {offsets = [0, 16], sizes = [32, 16], strides = [1, 1]} : vector<32x36xf32> to vector<32x16xf32>
    %cst_34 = arith.constant dense<0.000000e+00> : vector<8x16xf32>
    %90 = tpu.matmul %88, %89, %cst_34 {dimension_numbers = #tpu.dot_dimension_numbers<[1], [0], [0], [1], [0, 0, 1, 1], [], []>} : vector<8x32xf32>, vector<32x16xf32>, vector<8x16xf32> -> vector<8x16xf32>
    %91 = vector.extract_strided_slice %9 {offsets = [0, 16], sizes = [1, 16], strides = [1, 1]} : vector<1x36xf32> to vector<1x16xf32>
    %92 = vector.broadcast %91 : vector<1x16xf32> to vector<8x16xf32>
    %93 = arith.addf %90, %92 : vector<8x16xf32>
    %94 = vector.extract_strided_slice %4 {offsets = [2, 0, 0], sizes = [1, 32, 32], strides = [1, 1, 1]} : vector<3x32x32xf32> to vector<1x32x32xf32>
    %95 = vector.shape_cast %94 : vector<1x32x32xf32> to vector<32x32xf32>
    %cst_35 = arith.constant dense<0.000000e+00> : vector<8x32xf32>
    %96 = tpu.matmul %3, %95, %cst_35 {dimension_numbers = #tpu.dot_dimension_numbers<[1], [0], [0], [1], [0, 0, 1, 1], [], []>} : vector<8x32xf32>, vector<32x32xf32>, vector<8x32xf32> -> vector<8x32xf32>
    %97 = vector.extract_strided_slice %5 {offsets = [2, 0, 0], sizes = [1, 1, 32], strides = [1, 1, 1]} : vector<3x1x32xf32> to vector<1x1x32xf32>
    %98 = vector.shape_cast %97 : vector<1x1x32xf32> to vector<1x32xf32>
    %99 = vector.broadcast %98 : vector<1x32xf32> to vector<8x32xf32>
    %100 = arith.addf %96, %99 : vector<8x32xf32>
    %cst_36 = arith.constant dense<0.000000e+00> : vector<8xf32>
    %101 = vector.multi_reduction <add>, %100, %cst_36 [1] : vector<8x32xf32> to vector<8xf32>
    %102 = vector.shape_cast %101 : vector<8xf32> to vector<8x1xf32>
    %cst_37 = arith.constant 3.200000e+01 : f32
    %103 = vector.broadcast %cst_37 : f32 to vector<8x1xf32>
    %104 = arith.divf %102, %103 : vector<8x1xf32>
    %105 = vector.broadcast %104 : vector<8x1xf32> to vector<8x32xf32>
    %106 = arith.subf %100, %105 : vector<8x32xf32>
    %107 = vector.broadcast %104 : vector<8x1xf32> to vector<8x32xf32>
    %108 = arith.subf %100, %107 : vector<8x32xf32>
    %109 = arith.mulf %106, %108 : vector<8x32xf32>
    %cst_38 = arith.constant dense<0.000000e+00> : vector<8xf32>
    %110 = vector.multi_reduction <add>, %109, %cst_38 [1] : vector<8x32xf32> to vector<8xf32>
    %111 = vector.shape_cast %110 : vector<8xf32> to vector<8x1xf32>
    %cst_39 = arith.constant 3.200000e+01 : f32
    %112 = vector.broadcast %cst_39 : f32 to vector<8x1xf32>
    %113 = arith.divf %111, %112 : vector<8x1xf32>
    %114 = vector.broadcast %104 : vector<8x1xf32> to vector<8x32xf32>
    %115 = arith.subf %100, %114 : vector<8x32xf32>
    %cst_40 = arith.constant 9.99999974E-6 : f32
    %116 = vector.broadcast %cst_40 : f32 to vector<8x1xf32>
    %117 = arith.addf %113, %116 : vector<8x1xf32>
    %118 = math.rsqrt %117 : vector<8x1xf32>
    %119 = vector.broadcast %118 : vector<8x1xf32> to vector<8x32xf32>
    %120 = arith.mulf %115, %119 : vector<8x32xf32>
    %121 = vector.extract_strided_slice %6 {offsets = [2, 0, 0], sizes = [1, 1, 32], strides = [1, 1, 1]} : vector<3x1x32xf32> to vector<1x1x32xf32>
    %122 = vector.shape_cast %121 : vector<1x1x32xf32> to vector<1x32xf32>
    %123 = vector.broadcast %122 : vector<1x32xf32> to vector<8x32xf32>
    %124 = arith.mulf %120, %123 : vector<8x32xf32>
    %125 = vector.extract_strided_slice %7 {offsets = [2, 0, 0], sizes = [1, 1, 32], strides = [1, 1, 1]} : vector<3x1x32xf32> to vector<1x1x32xf32>
    %126 = vector.shape_cast %125 : vector<1x1x32xf32> to vector<1x32xf32>
    %127 = vector.broadcast %126 : vector<1x32xf32> to vector<8x32xf32>
    %128 = arith.addf %124, %127 : vector<8x32xf32>
    %cst_41 = arith.constant 0.000000e+00 : f32
    %129 = vector.broadcast %cst_41 : f32 to vector<8x32xf32>
    %130 = arith.maximumf %128, %129 : vector<8x32xf32>
    %131 = vector.extract_strided_slice %8 {offsets = [0, 32], sizes = [32, 4], strides = [1, 1]} : vector<32x36xf32> to vector<32x4xf32>
    %cst_42 = arith.constant dense<0.000000e+00> : vector<8x4xf32>
    %132 = tpu.matmul %130, %131, %cst_42 {dimension_numbers = #tpu.dot_dimension_numbers<[1], [0], [0], [1], [0, 0, 1, 1], [], []>} : vector<8x32xf32>, vector<32x4xf32>, vector<8x4xf32> -> vector<8x4xf32>
    %133 = vector.extract_strided_slice %9 {offsets = [0, 32], sizes = [1, 4], strides = [1, 1]} : vector<1x36xf32> to vector<1x4xf32>
    %134 = vector.broadcast %133 : vector<1x4xf32> to vector<8x4xf32>
    %135 = arith.addf %132, %134 : vector<8x4xf32>
    %136 = tpu.concatenate %51, %93, %135 in 1 : vector<8x16xf32>, vector<8x16xf32>, vector<8x4xf32> -> vector<8x36xf32>
    %c0_43 = arith.constant 0 : index
    %c0_44 = arith.constant 0 : index
    %137 = vector.load %arg9[%c0_43, %c0_44] : memref<8x36xf32, #tpu.memory_space<vmem>>, vector<8x36xf32>
    tpu.vector_store %arg9[%c0_43, %c0_44], %136 {strides = array<i32>} : memref<8x36xf32, #tpu.memory_space<vmem>>, vector<8x36xf32>,
    return
  }
  func.func @transform_0(%arg0: i32) -> (i32, i32) {
    %c0_i32 = arith.constant 0 : i32
    %c0_i32_0 = arith.constant 0 : i32
    return %arg0, %c0_i32 : i32, i32
  }
  func.func @transform_1(%arg0: i32) -> (i32, i32) {
    %c0_i32 = arith.constant 0 : i32
    %c0_i32_0 = arith.constant 0 : i32
    %c0_i32_1 = arith.constant 0 : i32
    return %c0_i32, %c0_i32_0 : i32, i32
  }
  func.func @transform_2(%arg0: i32) -> (i32, i32, i32) {
    %c0_i32 = arith.constant 0 : i32
    %c0_i32_0 = arith.constant 0 : i32
    %c0_i32_1 = arith.constant 0 : i32
    %c0_i32_2 = arith.constant 0 : i32
    return %c0_i32, %c0_i32_0, %c0_i32_1 : i32, i32, i32
  }
  func.func @transform_3(%arg0: i32) -> (i32, i32, i32) {
    %c0_i32 = arith.constant 0 : i32
    %c0_i32_0 = arith.constant 0 : i32
    %c0_i32_1 = arith.constant 0 : i32
    %c0_i32_2 = arith.constant 0 : i32
    return %c0_i32, %c0_i32_0, %c0_i32_1 : i32, i32, i32
  }
  func.func @transform_4(%arg0: i32) -> (i32, i32, i32) {
    %c0_i32 = arith.constant 0 : i32
    %c0_i32_0 = arith.constant 0 : i32
    %c0_i32_1 = arith.constant 0 : i32
    %c0_i32_2 = arith.constant 0 : i32
    return %c0_i32, %c0_i32_0, %c0_i32_1 : i32, i32, i32
  }
  func.func @transform_5(%arg0: i32) -> (i32, i32, i32) {
    %c0_i32 = arith.constant 0 : i32
    %c0_i32_0 = arith.constant 0 : i32
    %c0_i32_1 = arith.constant 0 : i32
    %c0_i32_2 = arith.constant 0 : i32
    return %c0_i32, %c0_i32_0, %c0_i32_1 : i32, i32, i32
  }
  func.func @transform_6(%arg0: i32) -> (i32, i32) {
    %c0_i32 = arith.constant 0 : i32
    %c0_i32_0 = arith.constant 0 : i32
    %c0_i32_1 = arith.constant 0 : i32
    return %c0_i32, %c0_i32_0 : i32, i32
  }
  func.func @transform_7(%arg0: i32) -> (i32, i32) {
    %c0_i32 = arith.constant 0 : i32
    %c0_i32_0 = arith.constant 0 : i32
    %c0_i32_1 = arith.constant 0 : i32
    return %c0_i32, %c0_i32_0 : i32, i32
  }
  func.func @transform_8(%arg0: i32) -> (i32, i32) {
    %c0_i32 = arith.constant 0 : i32
    %c0_i32_0 = arith.constant 0 : i32
    return %arg0, %c0_i32 : i32, i32
  }
}

</mosaic_0001>

<llo_original>
// kernel: tpu_custom_call.1
$region0: #{tpu_custom_call.1}
  #allocation0 [shape = 'u32[]', space=smem, size = 0x4, offset = 0x4, fixed_abs, tag = 'smem constant byte address 0x4 - core index']
  #allocation1 [shape = 'u32[144,128]{1,0:T(1,128)}', space=vmem, size = 0x12000, scoped, tag = 'internal scratch']
  %s0 = inlined_call_operand.hbm [shape: f32[8,16], index: 0, kind: input, shape index: {}]
  %s1 = inlined_call_operand.hbm [shape: f32[16,32], index: 1, kind: input, shape index: {}]
  %s2 = inlined_call_operand.hbm [shape: f32[3,32,32], index: 2, kind: input, shape index: {}]
  %s3 = inlined_call_operand.hbm [shape: f32[3,1,32], index: 3, kind: input, shape index: {}]
  %s4 = inlined_call_operand.hbm [shape: f32[3,1,32], index: 4, kind: input, shape index: {}]
  %s5 = inlined_call_operand.hbm [shape: f32[3,1,32], index: 5, kind: input, shape index: {}]
  %s6 = inlined_call_operand.hbm [shape: f32[32,36], index: 6, kind: input, shape index: {}]
  %s7 = inlined_call_operand.hbm [shape: f32[1,36], index: 7, kind: input, shape index: {}]
  %s8 = inlined_call_operand.hbm [shape: f32[8,36], index: 8, kind: output, shape index: {}]
  %s9 = sld [smem:[#allocation0]]
  $region74: #{tpu_custom_call.1} parent=0
    _
  %s11 = ssub.s32 1, %s9
  %s12 = scalar_select 0, %s11, %s9
  $region1: #{tpu_custom_call.1} parent=0
    #allocation2 [shape = 'u8[4096]{0}', space=vmem, size = 0x1000, scoped, tag = 'input window, operand 0, single buffered']
    #allocation3 [shape = 's32[1]{0}', space=sflag, size = 0x4, scoped, tag = 'scoped memory for tpu_custom_call.1']
    #allocation4 [shape = 's32[1]{0}', space=sflag, size = 0x4, scoped, tag = 'scoped memory for tpu_custom_call.1']
    #allocation5 [shape = 'u8[8192]{0}', space=vmem, size = 0x2000, scoped, tag = 'input window, operand 1, single buffered']
    #allocation6 [shape = 's32[1]{0}', space=sflag, size = 0x4, scoped, tag = 'scoped memory for tpu_custom_call.1']
    #allocation7 [shape = 'u8[49152]{0}', space=vmem, size = 0xc000, scoped, tag = 'input window, operand 2, single buffered']
    #allocation8 [shape = 'u8[1536]{0}', space=vmem, size = 0x800, scoped, tag = 'input window, operand 3, single buffered']
    #allocation9 [shape = 's32[1]{0}', space=sflag, size = 0x4, scoped, tag = 'scoped memory for tpu_custom_call.1']
    #allocation10 [shape = 'u8[1536]{0}', space=vmem, size = 0x800, scoped, tag = 'input window, operand 4, single buffered']
    #allocation11 [shape = 'u8[1536]{0}', space=vmem, size = 0x800, scoped, tag = 'input window, operand 5, single buffered']
    #allocation12 [shape = 's32[1]{0}', space=sflag, size = 0x4, scoped, tag = 'scoped memory for tpu_custom_call.1']
    #allocation13 [shape = 'u8[16384]{0}', space=vmem, size = 0x4000, scoped, tag = 'input window, operand 6, single buffered']
    #allocation14 [shape = 'u8[512]{0}', space=vmem, size = 0x400, scoped, tag = 'input window, operand 7, single buffered']
    #allocation15 [shape = 's32[1]{0}', space=sflag, size = 0x4, scoped, tag = 'scoped memory for tpu_custom_call.1']
    #allocation16 [shape = 'u8[4096]{0}', space=vmem, size = 0x1000, scoped, tag = 'output window, operand 0, single buffered']
    %13 = vsyncpa [#allocation3], 0
    %14 = vsyncpa [#allocation6], 0
    %15 = vsyncpa [#allocation9], 0
    %16 = vsyncpa [#allocation12], 0
    %17 = vsyncpa [#allocation15], 0
    %18 = vsyncpa [#allocation4], 0
    // Predicated region
    $region2: #{tpu_custom_call.1} parent=1 // pred_check
      _
    $region3: #{tpu_custom_call.1} parent=1 // pred_check_branch
      %20 = sbr.rel (0) target = $region5
    $region4: #{tpu_custom_call.1} parent=1 // pred_region
      %s22 = ssub.s32 128, 128
      %23 = vsyncadd [#allocation3], %s22
      %s25 = sshll.u32 [#allocation2], 4
      %s26 = int_to_ptr.vmem [resolvable:$true] %s25
      %28 = dma.hbm_to_vmem [thread:$0]  %s0, 128, %s26, [#allocation3]
    $region5: #{tpu_custom_call.1} parent=1 // pred_fallthru
      _
    // Predicated region
    $region6: #{tpu_custom_call.1} parent=1 // pred_check
      _
    $region7: #{tpu_custom_call.1} parent=1 // pred_check_branch
      %30 = sbr.rel (0) target = $region9
    $region8: #{tpu_custom_call.1} parent=1 // pred_region
      %s32 = ssub.s32 256, 256
      %33 = vsyncadd [#allocation6], %s32
      %s34 = sshll.u32 [#allocation5], 4
      %s35 = int_to_ptr.vmem [resolvable:$true] %s34
      %40 = dma.hbm_to_vmem [thread:$0]  %s1, 256, %s35, [#allocation6], 128, 128, 8
    $region9: #{tpu_custom_call.1} parent=1 // pred_fallthru
      _
    // Predicated region
    $region10: #{tpu_custom_call.1} parent=1 // pred_check
      _
    $region11: #{tpu_custom_call.1} parent=1 // pred_check_branch
      %42 = sbr.rel (0) target = $region13
    $region12: #{tpu_custom_call.1} parent=1 // pred_region
      %s44 = ssub.s32 1536, 1536
      %45 = vsyncadd [#allocation6], %s44
      %s46 = sshll.u32 [#allocation7], 4
      %s47 = int_to_ptr.vmem [resolvable:$true] %s46
      %52 = dma.hbm_to_vmem [thread:$0]  %s2, 1536, %s47, [#allocation6], 128, 128, 8
    $region13: #{tpu_custom_call.1} parent=1 // pred_fallthru
      _
    // Predicated region
    $region14: #{tpu_custom_call.1} parent=1 // pred_check
      _
    $region15: #{tpu_custom_call.1} parent=1 // pred_check_branch
      %54 = sbr.rel (0) target = $region17
    $region16: #{tpu_custom_call.1} parent=1 // pred_region
      %s56 = ssub.s32 48, 48
      %57 = vsyncadd [#allocation9], %s56
      %s58 = sshll.u32 [#allocation8], 4
      %s59 = int_to_ptr.vmem [resolvable:$true] %s58
      %64 = dma.hbm_to_vmem [thread:$0]  %s3, 48, %s59, [#allocation9], 16, 16, 1
    $region17: #{tpu_custom_call.1} parent=1 // pred_fallthru
      _
    // Predicated region
    $region18: #{tpu_custom_call.1} parent=1 // pred_check
      _
    $region19: #{tpu_custom_call.1} parent=1 // pred_check_branch
      %66 = sbr.rel (0) target = $region21
    $region20: #{tpu_custom_call.1} parent=1 // pred_region
      %s68 = ssub.s32 48, 48
      %69 = vsyncadd [#allocation9], %s68
      %s70 = sshll.u32 [#allocation10], 4
      %s71 = int_to_ptr.vmem [resolvable:$true] %s70
      %76 = dma.hbm_to_vmem [thread:$0]  %s4, 48, %s71, [#allocation9], 16, 16, 1
    $region21: #{tpu_custom_call.1} parent=1 // pred_fallthru
      _
    // Predicated region
    $region22: #{tpu_custom_call.1} parent=1 // pred_check
      _
    $region23: #{tpu_custom_call.1} parent=1 // pred_check_branch
      %78 = sbr.rel (0) target = $region25
    $region24: #{tpu_custom_call.1} parent=1 // pred_region
      %s80 = ssub.s32 48, 48
      %81 = vsyncadd [#allocation12], %s80
      %s82 = sshll.u32 [#allocation11], 4
      %s83 = int_to_ptr.vmem [resolvable:$true] %s82
      %88 = dma.hbm_to_vmem [thread:$0]  %s5, 48, %s83, [#allocation12], 16, 16, 1
    $region25: #{tpu_custom_call.1} parent=1 // pred_fallthru
      _
    // Predicated region
    $region26: #{tpu_custom_call.1} parent=1 // pred_check
      _
    $region27: #{tpu_custom_call.1} parent=1 // pred_check_branch
      %90 = sbr.rel (0) target = $region29
    $region28: #{tpu_custom_call.1} parent=1 // pred_region
      %s92 = ssub.s32 512, 512
      %93 = vsyncadd [#allocation12], %s92
      %s94 = sshll.u32 [#allocation13], 4
      %s95 = int_to_ptr.vmem [resolvable:$true] %s94
      %100 = dma.hbm_to_vmem [thread:$0]  %s6, 512, %s95, [#allocation12], 128, 128, 8
    $region29: #{tpu_custom_call.1} parent=1 // pred_fallthru
      _
    // Predicated region
    $region30: #{tpu_custom_call.1} parent=1 // pred_check
      _
    $region31: #{tpu_custom_call.1} parent=1 // pred_check_branch
      %102 = sbr.rel (0) target = $region33
    $region32: #{tpu_custom_call.1} parent=1 // pred_region
      %s104 = ssub.s32 16, 16
      %105 = vsyncadd [#allocation15], %s104
      %s107 = sshll.u32 [#allocation14], 4
      %s108 = int_to_ptr.vmem [resolvable:$true] %s107
      %110 = dma.hbm_to_vmem [thread:$0]  %s7, 16, %s108, [#allocation15]
    $region33: #{tpu_custom_call.1} parent=1 // pred_fallthru
      _
    // Predicated region
    $region34: #{tpu_custom_call.1} parent=1 // pred_check
      _
    $region35: #{tpu_custom_call.1} parent=1 // pred_check_branch
      %112 = sbr.rel (0) target = $region37
    $region36: #{tpu_custom_call.1} parent=1 // pred_region
      %113 = dma.done [#allocation3], 128
    $region37: #{tpu_custom_call.1} parent=1 // pred_fallthru
      _
    // Predicated region
    $region38: #{tpu_custom_call.1} parent=1 // pred_check
      _
    $region39: #{tpu_custom_call.1} parent=1 // pred_check_branch
      %115 = sbr.rel (0) target = $region41
    $region40: #{tpu_custom_call.1} parent=1 // pred_region
      %116 = dma.done [#allocation6], 256
    $region41: #{tpu_custom_call.1} parent=1 // pred_fallthru
      _
    // Predicated region
    $region42: #{tpu_custom_call.1} parent=1 // pred_check
      _
    $region43: #{tpu_custom_call.1} parent=1 // pred_check_branch
      %118 = sbr.rel (0) target = $region45
    $region44: #{tpu_custom_call.1} parent=1 // pred_region
      %119 = dma.done [#allocation6], 1536
    $region45: #{tpu_custom_call.1} parent=1 // pred_fallthru
      _
    // Predicated region
    $region46: #{tpu_custom_call.1} parent=1 // pred_check
      _
    $region47: #{tpu_custom_call.1} parent=1 // pred_check_branch
      %121 = sbr.rel (0) target = $region49
    $region48: #{tpu_custom_call.1} parent=1 // pred_region
      %122 = dma.done [#allocation9], 48
    $region49: #{tpu_custom_call.1} parent=1 // pred_fallthru
      _
    // Predicated region
    $region50: #{tpu_custom_call.1} parent=1 // pred_check
      _
    $region51: #{tpu_custom_call.1} parent=1 // pred_check_branch
      %124 = sbr.rel (0) target = $region53
    $region52: #{tpu_custom_call.1} parent=1 // pred_region
      %125 = dma.done [#allocation9], 48
    $region53: #{tpu_custom_call.1} parent=1 // pred_fallthru
      _
    // Predicated region
    $region54: #{tpu_custom_call.1} parent=1 // pred_check
      _
    $region55: #{tpu_custom_call.1} parent=1 // pred_check_branch
      %127 = sbr.rel (0) target = $region57
    $region56: #{tpu_custom_call.1} parent=1 // pred_region
      %128 = dma.done [#allocation12], 48
    $region57: #{tpu_custom_call.1} parent=1 // pred_fallthru
      _
    // Predicated region
    $region58: #{tpu_custom_call.1} parent=1 // pred_check
      _
    $region59: #{tpu_custom_call.1} parent=1 // pred_check_branch
      %130 = sbr.rel (0) target = $region61
    $region60: #{tpu_custom_call.1} parent=1 // pred_region
      %131 = dma.done [#allocation12], 512
    $region61: #{tpu_custom_call.1} parent=1 // pred_fallthru
      _
    // Predicated region
    $region62: #{tpu_custom_call.1} parent=1 // pred_check
      _
    $region63: #{tpu_custom_call.1} parent=1 // pred_check_branch
      %133 = sbr.rel (0) target = $region65
    $region64: #{tpu_custom_call.1} parent=1 // pred_region
      %134 = dma.done [#allocation15], 16
    $region65: #{tpu_custom_call.1} parent=1 // pred_fallthru
      _
    %v135 = vld [vmem:[#allocation2] sm:$0xff]
    %v136 = vld [vmem:[#allocation5] sm:$0xff]
    %v137 = vld [vmem:[#allocation5 + $0x8] sm:$0xff]
    %vm138 = vcmask 130048
    %v140 = vsel %vm138, %v135, 0
    %142 = vmatprep.subr.mxu0 0.0
    %143 = vmatpush1.msra.mxu0 %v136
    %144 = vmatprep.subr.mxu0 0.0
    %145 = vmatpush1.msra.mxu0 %v137
    %146 = vmatprep.subr.mxu0 0.0
    %147 = vmatpush1.msra.mxu0 0.0
    %148 = vmatprep.subr.mxu0 0.0
    %149 = vmatpush1.msra.mxu0 0.0
    %150 = vmatprep.subr.mxu0 0.0
    %151 = vmatpush1.msra.mxu0 0.0
    %152 = vmatprep.subr.mxu0 0.0
    %153 = vmatpush1.msra.mxu0 0.0
    %154 = vmatprep.subr.mxu0 0.0
    %155 = vmatpush1.msra.mxu0 0.0
    %156 = vmatprep.subr.mxu0 0.0
    %157 = vmatpush1.msra.mxu0 0.0
    %158 = vmatprep.subr.mxu0 0.0
    %159 = vmatpush1.msra.mxu0 0.0
    %160 = vmatprep.subr.mxu0 0.0
    %161 = vmatpush1.msra.mxu0 0.0
    %162 = vmatprep.subr.mxu0 0.0
    %163 = vmatpush1.msra.mxu0 0.0
    %164 = vmatprep.subr.mxu0 0.0
    %165 = vmatpush1.msra.mxu0 0.0
    %166 = vmatprep.subr.mxu0 0.0
    %167 = vmatpush1.msra.mxu0 0.0
    %168 = vmatprep.subr.mxu0 0.0
    %169 = vmatpush1.msra.mxu0 0.0
    %170 = vmatprep.subr.mxu0 0.0
    %171 = vmatpush1.msra.mxu0 0.0
    %172 = vmatprep.subr.mxu0 0.0
    %173 = vmatpush1.msra.mxu0 0.0
    %174 = vmatprep.subr.mxu0 0.0
    %175 = vmatpush1.msra.mxu0 0.0
    %176 = vmatprep.subr.mxu0 0.0
    %177 = vmatpush1.msra.mxu0 0.0
    %178 = vmatprep.subr.mxu0 0.0
    %179 = vmatpush1.msra.mxu0 0.0
    %180 = vmatprep.subr.mxu0 0.0
    %181 = vmatpush1.msra.mxu0 0.0
    %182 = vmatprep.subr.mxu0 0.0
    %183 = vmatpush1.msra.mxu0 0.0
    %184 = vmatprep.subr.mxu0 0.0
    %185 = vmatpush1.msra.mxu0 0.0
    %186 = vmatprep.subr.mxu0 0.0
    %187 = vmatpush1.msra.mxu0 0.0
    %188 = vmatprep.subr.mxu0 0.0
    %189 = vmatpush1.msra.mxu0 0.0
    %190 = vmatprep.subr.mxu0 0.0
    %191 = vmatpush1.msra.mxu0 0.0
    %192 = vmatprep.subr.mxu0 0.0
    %193 = vmatpush1.msra.mxu0 0.0
    %194 = vmatprep.subr.mxu0 0.0
    %195 = vmatpush1.msra.mxu0 0.0
    %196 = vmatprep.subr.mxu0 0.0
    %197 = vmatpush1.msra.mxu0 0.0
    %198 = vmatprep.subr.mxu0 0.0
    %199 = vmatpush1.msra.mxu0 0.0
    %200 = vmatprep.subr.mxu0 0.0
    %201 = vmatpush1.msra.mxu0 0.0
    %202 = vmatprep.subr.mxu0 0.0
    %203 = vmatpush1.msra.mxu0 0.0
    %204 = vmatprep.subr.mxu0 0.0
    %205 = vmatpush1.msra.mxu0 0.0
    %206 = vmatprep.mubr.f32.mxu0 0.0
    %207 = vmatmul.mubr.f32.gmra.mrb[0].mxu0 %v140
    %v208 = vpop.f32.mrb[0].mxu0
    %v209 = vadd.f32 0.0, %v208
    %v210 = vpop.f32.mrb[0].mxu0
    %211 = vdwg.mxu0
    %v212 = vtanh.pop %v209
    %v213 = vld [vmem:[#allocation7] sm:$0xff]
    %v214 = vld [vmem:[#allocation7 + $0x8] sm:$0xff]
    %v215 = vld [vmem:[#allocation7 + $0x10] sm:$0xff]
    %v216 = vld [vmem:[#allocation7 + $0x18] sm:$0xff]
    %v217 = vld [vmem:[#allocation7 + $0x20] sm:$0xff]
    %v218 = vld [vmem:[#allocation7 + $0x28] sm:$0xff]
    %v219 = vld [vmem:[#allocation7 + $0x30] sm:$0xff]
    %v220 = vld [vmem:[#allocation7 + $0x38] sm:$0xff]
    %v221 = vld [vmem:[#allocation7 + $0x40] sm:$0xff]
    %v222 = vld [vmem:[#allocation7 + $0x48] sm:$0xff]
    %v223 = vld [vmem:[#allocation7 + $0x50] sm:$0xff]
    %v224 = vld [vmem:[#allocation7 + $0x58] sm:$0xff]
    %v225 = vld [vmem:[#allocation8] sm:$0x1]
    %v226 = vld [vmem:[#allocation8 + $0x1] sm:$0x1]
    %v227 = vld [vmem:[#allocation8 + $0x2] sm:$0x1]
    %v228 = vld [vmem:[#allocation10] sm:$0x1]
    %v229 = vld [vmem:[#allocation10 + $0x1] sm:$0x1]
    %v230 = vld [vmem:[#allocation10 + $0x2] sm:$0x1]
    %v231 = vld [vmem:[#allocation11] sm:$0x1]
    %v232 = vld [vmem:[#allocation11 + $0x1] sm:$0x1]
    %v233 = vld [vmem:[#allocation11 + $0x2] sm:$0x1]
    %v234 = vld [vmem:[#allocation13] sm:$0xff]
    %v235 = vld [vmem:[#allocation13 + $0x8] sm:$0xff]
    %v236 = vld [vmem:[#allocation13 + $0x10] sm:$0xff]
    %v237 = vld [vmem:[#allocation13 + $0x18] sm:$0xff]
    %v238 = vld [vmem:[#allocation14] sm:$0x1]
    %v240 = vlaneseq
    %v241 = vshrl.u32 %v240, 7
    %v242 = vsub.s32 0, %v241
    %v243 = vrot.slane %v225, %v242
    %vm245 = vcmask 261120
    %v247 = vsel %vm245, %v212, 0
    %249 = vmatprep.subr.mxu0 0.0
    %250 = vmatpush1.msra.mxu0 %v213
    %251 = vmatprep.subr.mxu0 0.0
    %252 = vmatpush1.msra.mxu0 %v214
    %253 = vmatprep.subr.mxu0 0.0
    %254 = vmatpush1.msra.mxu0 %v215
    %255 = vmatprep.subr.mxu0 0.0
    %256 = vmatpush1.msra.mxu0 %v216
    %257 = vmatprep.subr.mxu0 0.0
    %258 = vmatpush1.msra.mxu0 0.0
    %259 = vmatprep.subr.mxu0 0.0
    %260 = vmatpush1.msra.mxu0 0.0
    %261 = vmatprep.subr.mxu0 0.0
    %262 = vmatpush1.msra.mxu0 0.0
    %263 = vmatprep.subr.mxu0 0.0
    %264 = vmatpush1.msra.mxu0 0.0
    %265 = vmatprep.subr.mxu0 0.0
    %266 = vmatpush1.msra.mxu0 0.0
    %267 = vmatprep.subr.mxu0 0.0
    %268 = vmatpush1.msra.mxu0 0.0
    %269 = vmatprep.subr.mxu0 0.0
    %270 = vmatpush1.msra.mxu0 0.0
    %271 = vmatprep.subr.mxu0 0.0
    %272 = vmatpush1.msra.mxu0 0.0
    %273 = vmatprep.subr.mxu0 0.0
    %274 = vmatpush1.msra.mxu0 0.0
    %275 = vmatprep.subr.mxu0 0.0
    %276 = vmatpush1.msra.mxu0 0.0
    %277 = vmatprep.subr.mxu0 0.0
    %278 = vmatpush1.msra.mxu0 0.0
    %279 = vmatprep.subr.mxu0 0.0
    %280 = vmatpush1.msra.mxu0 0.0
    %281 = vmatprep.subr.mxu0 0.0
    %282 = vmatpush1.msra.mxu0 0.0
    %283 = vmatprep.subr.mxu0 0.0
    %284 = vmatpush1.msra.mxu0 0.0
    %285 = vmatprep.subr.mxu0 0.0
    %286 = vmatpush1.msra.mxu0 0.0
    %287 = vmatprep.subr.mxu0 0.0
    %288 = vmatpush1.msra.mxu0 0.0
    %289 = vmatprep.subr.mxu0 0.0
    %290 = vmatpush1.msra.mxu0 0.0
    %291 = vmatprep.subr.mxu0 0.0
    %292 = vmatpush1.msra.mxu0 0.0
    %293 = vmatprep.subr.mxu0 0.0
    %294 = vmatpush1.msra.mxu0 0.0
    %295 = vmatprep.subr.mxu0 0.0
    %296 = vmatpush1.msra.mxu0 0.0
    %297 = vmatprep.subr.mxu0 0.0
    %298 = vmatpush1.msra.mxu0 0.0
    %299 = vmatprep.subr.mxu0 0.0
    %300 = vmatpush1.msra.mxu0 0.0
    %301 = vmatprep.subr.mxu0 0.0
    %302 = vmatpush1.msra.mxu0 0.0
    %303 = vmatprep.subr.mxu0 0.0
    %304 = vmatpush1.msra.mxu0 0.0
    %305 = vmatprep.subr.mxu0 0.0
    %306 = vmatpush1.msra.mxu0 0.0
    %307 = vmatprep.subr.mxu0 0.0
    %308 = vmatpush1.msra.mxu0 0.0
    %309 = vmatprep.subr.mxu0 0.0
    %310 = vmatpush1.msra.mxu0 0.0
    %311 = vmatprep.subr.mxu0 0.0
    %312 = vmatpush1.msra.mxu0 0.0
    %313 = vmatprep.mubr.f32.mxu0 0.0
    %314 = vmatmul.mubr.f32.gmra.mrb[0].mxu0 %v247
    %v315 = vpop.f32.mrb[0].mxu0
    %v316 = vadd.f32 %v243, %v315
    %v317 = vpop.f32.mrb[0].mxu0
    %318 = vdwg.mxu0
    %v319 = vsel %vm245, %v316, 0.0
    %320 = vadd.xlane.f32.xlu0 %v319
    %v321 = vpop.xlane.xlu0 %320
    %v322 = vrcp.pop 32.0
    %v323 = vmul.f32 %v321, %v322
    %v324 = vsub.f32 %v316, %v323
    %v325 = vmul.f32 %v324, %v324
    %v326 = vsel %vm245, %v325, 0.0
    %327 = vadd.xlane.f32.xlu0 %v326
    %v328 = vpop.xlane.xlu0 %327
    %v329 = vmul.f32 %v328, %v322
    %v330 = vadd.f32 %v329, 1e-05
    %v331 = vrsqrt.pop %v330
    %v332 = vmul.f32 %v324, %v331
    %v334 = vlaneseq
    %v335 = vshrl.u32 %v334, 7
    %v336 = vsub.s32 0, %v335
    %v337 = vrot.slane %v228, %v336
    %v339 = vmul.f32 %v332, %v337
    %v341 = vlaneseq
    %v342 = vshrl.u32 %v341, 7
    %v343 = vsub.s32 0, %v342
    %v344 = vrot.slane %v231, %v343
    %v346 = vadd.f32 %v339, %v344
    %v347 = vmax.f32 %v346, 0.0
    %v349 = vlaneseq
    %v350 = vshrl.u32 %v349, 7
    %v351 = vsub.s32 0, %v350
    %v352 = vrot.slane %v238, %v351
    %v355 = vsel %vm245, %v347, 0
    %357 = vmatprep.subr.mxu0 0.0
    %358 = vmatpush1.msra.mxu0 %v234
    %359 = vmatprep.subr.mxu0 0.0
    %360 = vmatpush1.msra.mxu0 %v235
    %361 = vmatprep.subr.mxu0 0.0
    %362 = vmatpush1.msra.mxu0 %v236
    %363 = vmatprep.subr.mxu0 0.0
    %364 = vmatpush1.msra.mxu0 %v237
    %365 = vmatprep.subr.mxu0 0.0
    %366 = vmatpush1.msra.mxu0 0.0
    %367 = vmatprep.subr.mxu0 0.0
    %368 = vmatpush1.msra.mxu0 0.0
    %369 = vmatprep.subr.mxu0 0.0
    %370 = vmatpush1.msra.mxu0 0.0
    %371 = vmatprep.subr.mxu0 0.0
    %372 = vmatpush1.msra.mxu0 0.0
    %373 = vmatprep.subr.mxu0 0.0
    %374 = vmatpush1.msra.mxu0 0.0
    %375 = vmatprep.subr.mxu0 0.0
    %376 = vmatpush1.msra.mxu0 0.0
    %377 = vmatprep.subr.mxu0 0.0
    %378 = vmatpush1.msra.mxu0 0.0
    %379 = vmatprep.subr.mxu0 0.0
    %380 = vmatpush1.msra.mxu0 0.0
    %381 = vmatprep.subr.mxu0 0.0
    %382 = vmatpush1.msra.mxu0 0.0
    %383 = vmatprep.subr.mxu0 0.0
    %384 = vmatpush1.msra.mxu0 0.0
    %385 = vmatprep.subr.mxu0 0.0
    %386 = vmatpush1.msra.mxu0 0.0
    %387 = vmatprep.subr.mxu0 0.0
    %388 = vmatpush1.msra.mxu0 0.0
    %389 = vmatprep.subr.mxu0 0.0
    %390 = vmatpush1.msra.mxu0 0.0
    %391 = vmatprep.subr.mxu0 0.0
    %392 = vmatpush1.msra.mxu0 0.0
    %393 = vmatprep.subr.mxu0 0.0
    %394 = vmatpush1.msra.mxu0 0.0
    %395 = vmatprep.subr.mxu0 0.0
    %396 = vmatpush1.msra.mxu0 0.0
    %397 = vmatprep.subr.mxu0 0.0
    %398 = vmatpush1.msra.mxu0 0.0
    %399 = vmatprep.subr.mxu0 0.0
    %400 = vmatpush1.msra.mxu0 0.0
    %401 = vmatprep.subr.mxu0 0.0
    %402 = vmatpush1.msra.mxu0 0.0
    %403 = vmatprep.subr.mxu0 0.0
    %404 = vmatpush1.msra.mxu0 0.0
    %405 = vmatprep.subr.mxu0 0.0
    %406 = vmatpush1.msra.mxu0 0.0
    %407 = vmatprep.subr.mxu0 0.0
    %408 = vmatpush1.msra.mxu0 0.0
    %409 = vmatprep.subr.mxu0 0.0
    %410 = vmatpush1.msra.mxu0 0.0
    %411 = vmatprep.subr.mxu0 0.0
    %412 = vmatpush1.msra.mxu0 0.0
    %413 = vmatprep.subr.mxu0 0.0
    %414 = vmatpush1.msra.mxu0 0.0
    %415 = vmatprep.subr.mxu0 0.0
    %416 = vmatpush1.msra.mxu0 0.0
    %417 = vmatprep.subr.mxu0 0.0
    %418 = vmatpush1.msra.mxu0 0.0
    %419 = vmatprep.subr.mxu0 0.0
    %420 = vmatpush1.msra.mxu0 0.0
    %421 = vmatprep.mubr.f32.mxu0 0.0
    %422 = vmatmul.mubr.f32.gmra.mrb[0].mxu0 %v355
    %v423 = vpop.f32.mrb[0].mxu0
    %v424 = vadd.f32 %v352, %v423
    %v425 = vpop.f32.mrb[0].mxu0
    %426 = vdwg.mxu0
    %v428 = vlaneseq
    %v429 = vshrl.u32 %v428, 7
    %v430 = vsub.s32 0, %v429
    %v431 = vrot.slane %v226, %v430
    %433 = vmatprep.subr.mxu0 0.0
    %434 = vmatpush1.msra.mxu0 %v217
    %435 = vmatprep.subr.mxu0 0.0
    %436 = vmatpush1.msra.mxu0 %v218
    %437 = vmatprep.subr.mxu0 0.0
    %438 = vmatpush1.msra.mxu0 %v219
    %439 = vmatprep.subr.mxu0 0.0
    %440 = vmatpush1.msra.mxu0 %v220
    %441 = vmatprep.subr.mxu0 0.0
    %442 = vmatpush1.msra.mxu0 0.0
    %443 = vmatprep.subr.mxu0 0.0
    %444 = vmatpush1.msra.mxu0 0.0
    %445 = vmatprep.subr.mxu0 0.0
    %446 = vmatpush1.msra.mxu0 0.0
    %447 = vmatprep.subr.mxu0 0.0
    %448 = vmatpush1.msra.mxu0 0.0
    %449 = vmatprep.subr.mxu0 0.0
    %450 = vmatpush1.msra.mxu0 0.0
    %451 = vmatprep.subr.mxu0 0.0
    %452 = vmatpush1.msra.mxu0 0.0
    %453 = vmatprep.subr.mxu0 0.0
    %454 = vmatpush1.msra.mxu0 0.0
    %455 = vmatprep.subr.mxu0 0.0
    %456 = vmatpush1.msra.mxu0 0.0
    %457 = vmatprep.subr.mxu0 0.0
    %458 = vmatpush1.msra.mxu0 0.0
    %459 = vmatprep.subr.mxu0 0.0
    %460 = vmatpush1.msra.mxu0 0.0
    %461 = vmatprep.subr.mxu0 0.0
    %462 = vmatpush1.msra.mxu0 0.0
    %463 = vmatprep.subr.mxu0 0.0
    %464 = vmatpush1.msra.mxu0 0.0
    %465 = vmatprep.subr.mxu0 0.0
    %466 = vmatpush1.msra.mxu0 0.0
    %467 = vmatprep.subr.mxu0 0.0
    %468 = vmatpush1.msra.mxu0 0.0
    %469 = vmatprep.subr.mxu0 0.0
    %470 = vmatpush1.msra.mxu0 0.0
    %471 = vmatprep.subr.mxu0 0.0
    %472 = vmatpush1.msra.mxu0 0.0
    %473 = vmatprep.subr.mxu0 0.0
    %474 = vmatpush1.msra.mxu0 0.0
    %475 = vmatprep.subr.mxu0 0.0
    %476 = vmatpush1.msra.mxu0 0.0
    %477 = vmatprep.subr.mxu0 0.0
    %478 = vmatpush1.msra.mxu0 0.0
    %479 = vmatprep.subr.mxu0 0.0
    %480 = vmatpush1.msra.mxu0 0.0
    %481 = vmatprep.subr.mxu0 0.0
    %482 = vmatpush1.msra.mxu0 0.0
    %483 = vmatprep.subr.mxu0 0.0
    %484 = vmatpush1.msra.mxu0 0.0
    %485 = vmatprep.subr.mxu0 0.0
    %486 = vmatpush1.msra.mxu0 0.0
    %487 = vmatprep.subr.mxu0 0.0
    %488 = vmatpush1.msra.mxu0 0.0
    %489 = vmatprep.subr.mxu0 0.0
    %490 = vmatpush1.msra.mxu0 0.0
    %491 = vmatprep.subr.mxu0 0.0
    %492 = vmatpush1.msra.mxu0 0.0
    %493 = vmatprep.subr.mxu0 0.0
    %494 = vmatpush1.msra.mxu0 0.0
    %495 = vmatprep.subr.mxu0 0.0
    %496 = vmatpush1.msra.mxu0 0.0
    %497 = vmatprep.mubr.f32.mxu0 0.0
    %498 = vmatmul.mubr.f32.gmra.mrb[0].mxu0 %v247
    %v499 = vpop.f32.mrb[0].mxu0
    %v500 = vadd.f32 %v431, %v499
    %v501 = vpop.f32.mrb[0].mxu0
    %502 = vdwg.mxu0
    %v503 = vsel %vm245, %v500, 0.0
    %504 = vadd.xlane.f32.xlu0 %v503
    %v505 = vpop.xlane.xlu0 %504
    %v506 = vmul.f32 %v505, %v322
    %v507 = vsub.f32 %v500, %v506
    %v508 = vmul.f32 %v507, %v507
    %v509 = vsel %vm245, %v508, 0.0
    %510 = vadd.xlane.f32.xlu0 %v509
    %v511 = vpop.xlane.xlu0 %510
    %v512 = vmul.f32 %v511, %v322
    %v513 = vadd.f32 %v512, 1e-05
    %v514 = vrsqrt.pop %v513
    %v515 = vmul.f32 %v507, %v514
    %v517 = vlaneseq
    %v518 = vshrl.u32 %v517, 7
    %v519 = vsub.s32 0, %v518
    %v520 = vrot.slane %v229, %v519
    %v522 = vmul.f32 %v515, %v520
    %v524 = vlaneseq
    %v525 = vshrl.u32 %v524, 7
    %v526 = vsub.s32 0, %v525
    %v527 = vrot.slane %v232, %v526
    %v529 = vadd.f32 %v522, %v527
    %v530 = vmax.f32 %v529, 0.0
    %535 = vrot.lane.b32.xlu0 %v234, 112
    %v536 = vpop.permute.xlu0 %535
    %537 = vrot.lane.b32.xlu0 %v235, 112
    %v538 = vpop.permute.xlu0 %537
    %539 = vrot.lane.b32.xlu0 %v236, 112
    %v540 = vpop.permute.xlu0 %539
    %541 = vrot.lane.b32.xlu0 %v237, 112
    %v542 = vpop.permute.xlu0 %541
    %547 = vrot.lane.b32.xlu0 %v352, 112
    %v548 = vpop.permute.xlu0 %547
    %v551 = vsel %vm245, %v530, 0
    %553 = vmatprep.subr.mxu0 0.0
    %554 = vmatpush1.msra.mxu0 %v536
    %555 = vmatprep.subr.mxu0 0.0
    %556 = vmatpush1.msra.mxu0 %v538
    %557 = vmatprep.subr.mxu0 0.0
    %558 = vmatpush1.msra.mxu0 %v540
    %559 = vmatprep.subr.mxu0 0.0
    %560 = vmatpush1.msra.mxu0 %v542
    %561 = vmatprep.subr.mxu0 0.0
    %562 = vmatpush1.msra.mxu0 0.0
    %563 = vmatprep.subr.mxu0 0.0
    %564 = vmatpush1.msra.mxu0 0.0
    %565 = vmatprep.subr.mxu0 0.0
    %566 = vmatpush1.msra.mxu0 0.0
    %567 = vmatprep.subr.mxu0 0.0
    %568 = vmatpush1.msra.mxu0 0.0
    %569 = vmatprep.subr.mxu0 0.0
    %570 = vmatpush1.msra.mxu0 0.0
    %571 = vmatprep.subr.mxu0 0.0
    %572 = vmatpush1.msra.mxu0 0.0
    %573 = vmatprep.subr.mxu0 0.0
    %574 = vmatpush1.msra.mxu0 0.0
    %575 = vmatprep.subr.mxu0 0.0
    %576 = vmatpush1.msra.mxu0 0.0
    %577 = vmatprep.subr.mxu0 0.0
    %578 = vmatpush1.msra.mxu0 0.0
    %579 = vmatprep.subr.mxu0 0.0
    %580 = vmatpush1.msra.mxu0 0.0
    %581 = vmatprep.subr.mxu0 0.0
    %582 = vmatpush1.msra.mxu0 0.0
    %583 = vmatprep.subr.mxu0 0.0
    %584 = vmatpush1.msra.mxu0 0.0
    %585 = vmatprep.subr.mxu0 0.0
    %586 = vmatpush1.msra.mxu0 0.0
    %587 = vmatprep.subr.mxu0 0.0
    %588 = vmatpush1.msra.mxu0 0.0
    %589 = vmatprep.subr.mxu0 0.0
    %590 = vmatpush1.msra.mxu0 0.0
    %591 = vmatprep.subr.mxu0 0.0
    %592 = vmatpush1.msra.mxu0 0.0
    %593 = vmatprep.subr.mxu0 0.0
    %594 = vmatpush1.msra.mxu0 0.0
    %595 = vmatprep.subr.mxu0 0.0
    %596 = vmatpush1.msra.mxu0 0.0
    %597 = vmatprep.subr.mxu0 0.0
    %598 = vmatpush1.msra.mxu0 0.0
    %599 = vmatprep.subr.mxu0 0.0
    %600 = vmatpush1.msra.mxu0 0.0
    %601 = vmatprep.subr.mxu0 0.0
    %602 = vmatpush1.msra.mxu0 0.0
    %603 = vmatprep.subr.mxu0 0.0
    %604 = vmatpush1.msra.mxu0 0.0
    %605 = vmatprep.subr.mxu0 0.0
    %606 = vmatpush1.msra.mxu0 0.0
    %607 = vmatprep.subr.mxu0 0.0
    %608 = vmatpush1.msra.mxu0 0.0
    %609 = vmatprep.subr.mxu0 0.0
    %610 = vmatpush1.msra.mxu0 0.0
    %611 = vmatprep.subr.mxu0 0.0
    %612 = vmatpush1.msra.mxu0 0.0
    %613 = vmatprep.subr.mxu0 0.0
    %614 = vmatpush1.msra.mxu0 0.0
    %615 = vmatprep.subr.mxu0 0.0
    %616 = vmatpush1.msra.mxu0 0.0
    %617 = vmatprep.mubr.f32.mxu0 0.0
    %618 = vmatmul.mubr.f32.gmra.mrb[0].mxu0 %v551
    %v619 = vpop.f32.mrb[0].mxu0
    %v620 = vadd.f32 %v548, %v619
    %v621 = vpop.f32.mrb[0].mxu0
    %622 = vdwg.mxu0
    %v624 = vlaneseq
    %v625 = vshrl.u32 %v624, 7
    %v626 = vsub.s32 0, %v625
    %v627 = vrot.slane %v227, %v626
    %629 = vmatprep.subr.mxu0 0.0
    %630 = vmatpush1.msra.mxu0 %v221
    %631 = vmatprep.subr.mxu0 0.0
    %632 = vmatpush1.msra.mxu0 %v222
    %633 = vmatprep.subr.mxu0 0.0
    %634 = vmatpush1.msra.mxu0 %v223
    %635 = vmatprep.subr.mxu0 0.0
    %636 = vmatpush1.msra.mxu0 %v224
    %637 = vmatprep.subr.mxu0 0.0
    %638 = vmatpush1.msra.mxu0 0.0
    %639 = vmatprep.subr.mxu0 0.0
    %640 = vmatpush1.msra.mxu0 0.0
    %641 = vmatprep.subr.mxu0 0.0
    %642 = vmatpush1.msra.mxu0 0.0
    %643 = vmatprep.subr.mxu0 0.0
    %644 = vmatpush1.msra.mxu0 0.0
    %645 = vmatprep.subr.mxu0 0.0
    %646 = vmatpush1.msra.mxu0 0.0
    %647 = vmatprep.subr.mxu0 0.0
    %648 = vmatpush1.msra.mxu0 0.0
    %649 = vmatprep.subr.mxu0 0.0
    %650 = vmatpush1.msra.mxu0 0.0
    %651 = vmatprep.subr.mxu0 0.0
    %652 = vmatpush1.msra.mxu0 0.0
    %653 = vmatprep.subr.mxu0 0.0
    %654 = vmatpush1.msra.mxu0 0.0
    %655 = vmatprep.subr.mxu0 0.0
    %656 = vmatpush1.msra.mxu0 0.0
    %657 = vmatprep.subr.mxu0 0.0
    %658 = vmatpush1.msra.mxu0 0.0
    %659 = vmatprep.subr.mxu0 0.0
    %660 = vmatpush1.msra.mxu0 0.0
    %661 = vmatprep.subr.mxu0 0.0
    %662 = vmatpush1.msra.mxu0 0.0
    %663 = vmatprep.subr.mxu0 0.0
    %664 = vmatpush1.msra.mxu0 0.0
    %665 = vmatprep.subr.mxu0 0.0
    %666 = vmatpush1.msra.mxu0 0.0
    %667 = vmatprep.subr.mxu0 0.0
    %668 = vmatpush1.msra.mxu0 0.0
    %669 = vmatprep.subr.mxu0 0.0
    %670 = vmatpush1.msra.mxu0 0.0
    %671 = vmatprep.subr.mxu0 0.0
    %672 = vmatpush1.msra.mxu0 0.0
    %673 = vmatprep.subr.mxu0 0.0
    %674 = vmatpush1.msra.mxu0 0.0
    %675 = vmatprep.subr.mxu0 0.0
    %676 = vmatpush1.msra.mxu0 0.0
    %677 = vmatprep.subr.mxu0 0.0
    %678 = vmatpush1.msra.mxu0 0.0
    %679 = vmatprep.subr.mxu0 0.0
    %680 = vmatpush1.msra.mxu0 0.0
    %681 = vmatprep.subr.mxu0 0.0
    %682 = vmatpush1.msra.mxu0 0.0
    %683 = vmatprep.subr.mxu0 0.0
    %684 = vmatpush1.msra.mxu0 0.0
    %685 = vmatprep.subr.mxu0 0.0
    %686 = vmatpush1.msra.mxu0 0.0
    %687 = vmatprep.subr.mxu0 0.0
    %688 = vmatpush1.msra.mxu0 0.0
    %689 = vmatprep.subr.mxu0 0.0
    %690 = vmatpush1.msra.mxu0 0.0
    %691 = vmatprep.subr.mxu0 0.0
    %692 = vmatpush1.msra.mxu0 0.0
    %693 = vmatprep.mubr.f32.mxu0 0.0
    %694 = vmatmul.mubr.f32.gmra.mrb[0].mxu0 %v247
    %v695 = vpop.f32.mrb[0].mxu0
    %v696 = vadd.f32 %v627, %v695
    %v697 = vpop.f32.mrb[0].mxu0
    %698 = vdwg.mxu0
    %v699 = vsel %vm245, %v696, 0.0
    %700 = vadd.xlane.f32.xlu0 %v699
    %v701 = vpop.xlane.xlu0 %700
    %v702 = vmul.f32 %v701, %v322
    %v703 = vsub.f32 %v696, %v702
    %v704 = vmul.f32 %v703, %v703
    %v705 = vsel %vm245, %v704, 0.0
    %706 = vadd.xlane.f32.xlu0 %v705
    %v707 = vpop.xlane.xlu0 %706
    %v708 = vmul.f32 %v707, %v322
    %v709 = vadd.f32 %v708, 1e-05
    %v710 = vrsqrt.pop %v709
    %v711 = vmul.f32 %v703, %v710
    %v713 = vlaneseq
    %v714 = vshrl.u32 %v713, 7
    %v715 = vsub.s32 0, %v714
    %v716 = vrot.slane %v230, %v715
    %v718 = vmul.f32 %v711, %v716
    %v720 = vlaneseq
    %v721 = vshrl.u32 %v720, 7
    %v722 = vsub.s32 0, %v721
    %v723 = vrot.slane %v233, %v722
    %v725 = vadd.f32 %v718, %v723
    %v726 = vmax.f32 %v725, 0.0
    %727 = vrot.lane.b32.xlu0 %v234, 96
    %v728 = vpop.permute.xlu0 %727
    %729 = vrot.lane.b32.xlu0 %v235, 96
    %v730 = vpop.permute.xlu0 %729
    %731 = vrot.lane.b32.xlu0 %v236, 96
    %v732 = vpop.permute.xlu0 %731
    %733 = vrot.lane.b32.xlu0 %v237, 96
    %v734 = vpop.permute.xlu0 %733
    %739 = vrot.lane.b32.xlu0 %v352, 96
    %v740 = vpop.permute.xlu0 %739
    %v743 = vsel %vm245, %v726, 0
    %745 = vmatprep.subr.mxu0 0.0
    %746 = vmatpush1.msra.mxu0 %v728
    %747 = vmatprep.subr.mxu0 0.0
    %748 = vmatpush1.msra.mxu0 %v730
    %749 = vmatprep.subr.mxu0 0.0
    %750 = vmatpush1.msra.mxu0 %v732
    %751 = vmatprep.subr.mxu0 0.0
    %752 = vmatpush1.msra.mxu0 %v734
    %753 = vmatprep.subr.mxu0 0.0
    %754 = vmatpush1.msra.mxu0 0.0
    %755 = vmatprep.subr.mxu0 0.0
    %756 = vmatpush1.msra.mxu0 0.0
    %757 = vmatprep.subr.mxu0 0.0
    %758 = vmatpush1.msra.mxu0 0.0
    %759 = vmatprep.subr.mxu0 0.0
    %760 = vmatpush1.msra.mxu0 0.0
    %761 = vmatprep.subr.mxu0 0.0
    %762 = vmatpush1.msra.mxu0 0.0
    %763 = vmatprep.subr.mxu0 0.0
    %764 = vmatpush1.msra.mxu0 0.0
    %765 = vmatprep.subr.mxu0 0.0
    %766 = vmatpush1.msra.mxu0 0.0
    %767 = vmatprep.subr.mxu0 0.0
    %768 = vmatpush1.msra.mxu0 0.0
    %769 = vmatprep.subr.mxu0 0.0
    %770 = vmatpush1.msra.mxu0 0.0
    %771 = vmatprep.subr.mxu0 0.0
    %772 = vmatpush1.msra.mxu0 0.0
    %773 = vmatprep.subr.mxu0 0.0
    %774 = vmatpush1.msra.mxu0 0.0
    %775 = vmatprep.subr.mxu0 0.0
    %776 = vmatpush1.msra.mxu0 0.0
    %777 = vmatprep.subr.mxu0 0.0
    %778 = vmatpush1.msra.mxu0 0.0
    %779 = vmatprep.subr.mxu0 0.0
    %780 = vmatpush1.msra.mxu0 0.0
    %781 = vmatprep.subr.mxu0 0.0
    %782 = vmatpush1.msra.mxu0 0.0
    %783 = vmatprep.subr.mxu0 0.0
    %784 = vmatpush1.msra.mxu0 0.0
    %785 = vmatprep.subr.mxu0 0.0
    %786 = vmatpush1.msra.mxu0 0.0
    %787 = vmatprep.subr.mxu0 0.0
    %788 = vmatpush1.msra.mxu0 0.0
    %789 = vmatprep.subr.mxu0 0.0
    %790 = vmatpush1.msra.mxu0 0.0
    %791 = vmatprep.subr.mxu0 0.0
    %792 = vmatpush1.msra.mxu0 0.0
    %793 = vmatprep.subr.mxu0 0.0
    %794 = vmatpush1.msra.mxu0 0.0
    %795 = vmatprep.subr.mxu0 0.0
    %796 = vmatpush1.msra.mxu0 0.0
    %797 = vmatprep.subr.mxu0 0.0
    %798 = vmatpush1.msra.mxu0 0.0
    %799 = vmatprep.subr.mxu0 0.0
    %800 = vmatpush1.msra.mxu0 0.0
    %801 = vmatprep.subr.mxu0 0.0
    %802 = vmatpush1.msra.mxu0 0.0
    %803 = vmatprep.subr.mxu0 0.0
    %804 = vmatpush1.msra.mxu0 0.0
    %805 = vmatprep.subr.mxu0 0.0
    %806 = vmatpush1.msra.mxu0 0.0
    %807 = vmatprep.subr.mxu0 0.0
    %808 = vmatpush1.msra.mxu0 0.0
    %809 = vmatprep.mubr.f32.mxu0 0.0
    %810 = vmatmul.mubr.f32.gmra.mrb[0].mxu0 %v743
    %v811 = vpop.f32.mrb[0].mxu0
    %v812 = vadd.f32 %v740, %v811
    %v813 = vpop.f32.mrb[0].mxu0
    %814 = vdwg.mxu0
    %816 = vrot.lane.b32.xlu0 %v620, 16
    %v817 = vpop.permute.xlu0 %816
    %820 = vrot.lane.b32.xlu0 %v812, 32
    %v821 = vpop.permute.xlu0 %820
    %v823 = vsel %vm138, %v424, %v817
    %v824 = vsel %vm245, %v823, %v821
    %vm825 = vcmask 293888
    %826 = vst.msk [vmem:[#allocation16] sm:$0xff] %vm825, %v824
    // Predicated region
    $region66: #{tpu_custom_call.1} parent=1 // pred_check
      _
    $region67: #{tpu_custom_call.1} parent=1 // pred_check_branch
      %828 = sbr.rel (0) target = $region69
    $region68: #{tpu_custom_call.1} parent=1 // pred_region
      %s830 = ssub.s32 128, 128
      %831 = vsyncadd [#allocation4], %s830
      %s833 = sshll.u32 [#allocation16], 4
      %s834 = int_to_ptr.vmem [resolvable:$true] %s833
      %836 = dma.vmem_to_hbm [thread:$0]  %s834, 128, %s8, [#allocation4]
    $region69: #{tpu_custom_call.1} parent=1 // pred_fallthru
      _
    // Predicated region
    $region70: #{tpu_custom_call.1} parent=1 // pred_check
      _
    $region71: #{tpu_custom_call.1} parent=1 // pred_check_branch
      %838 = sbr.rel (0) target = $region73
    $region72: #{tpu_custom_call.1} parent=1 // pred_region
      %839 = dma.done [#allocation4], 128
    $region73: #{tpu_custom_call.1} parent=1 // pred_fallthru
      _
    %840 = vsyncpa [#allocation3], 1
    %841 = vsyncpa [#allocation6], 1
    %842 = vsyncpa [#allocation9], 1
    %843 = vsyncpa [#allocation12], 1
    %844 = vsyncpa [#allocation15], 1
    %845 = vsyncpa [#allocation4], 1

</llo_original>
